<compile_context>
chip_gen: v6e
topology: v6e:2x2x1
jax: 0.10.0
libtpu: 0.0.40
codegen_flags: <defaults>
</compile_context>

<pallas_src>
import functools

import jax
import jax.numpy as jnp
from jax.experimental import pallas as pl
from jax.experimental.pallas import tpu as pltpu


def _drop_path_kernel(scale_ref, x_ref, o_ref):
    """One grid step == (TB samples) x (TN tokens) x (C channels).

    scale_ref : (TB, 1, 1) f32 — per-sample scale, 0.0 or 1/keep_prob.
    x_ref     : (TB, TN, C) activation tile in its native dtype.
    o_ref     : (TB, TN, C) output tile, same dtype as x.
    """
    # Single broadcast multiply (VPU) + one rounding cast at the store.  The kernel
    # is HBM-bound; this guarantees the VALU slot never becomes binding.
    o_ref[...] = (x_ref[...] * scale_ref[...]).astype(o_ref.dtype)


# ~2 MiB of activation per grid step: big enough to sit at HBM roofline on
# v5e/v6e/v7x, small enough that 2-in + 2-out pipeline buffers (~8 MiB) fit the
# default scoped VMEM on every generation (16 MiB v5e is the tightest).
_BLOCK_BUDGET_BYTES = 2 * 1024 * 1024


@jax.jit
def _drop_path_pallas(x, scale):
    """x: (B, N, C) native dtype; scale: (B, 1, 1) f32 per-sample scale."""
    B, N, C = x.shape
    itemsize = jnp.dtype(x.dtype).itemsize
    bytes_per_sample = N * C * itemsize

    # Samples per block: largest divisor of B whose slab fits the budget.
    cap_tb = max(1, _BLOCK_BUDGET_BYTES // max(bytes_per_sample, 1))
    tb = 1
    for d in range(1, B + 1):
        if B % d == 0 and d <= cap_tb:
            tb = d

    # If even one sample exceeds the budget, tile the token axis too
    # (TN a multiple of 16 keeps the (sublane,128) layout legal for bf16 and f32).
    tn = N
    if tb == 1 and bytes_per_sample > _BLOCK_BUDGET_BYTES:
        for d in range(1, N + 1):
            if N % d == 0 and d % 16 == 0 and d * C * itemsize <= _BLOCK_BUDGET_BYTES:
                tn = d

    grid = (B // tb, N // tn)
    return pl.pallas_call(
        _drop_path_kernel,
        out_shape=jax.ShapeDtypeStruct((B, N, C), x.dtype),
        grid=grid,
        in_specs=[
            # per-sample scale: tiny (TB,1,1) VMEM block, broadcast inside kernel
            pl.BlockSpec((tb, 1, 1), lambda i, j: (i, 0, 0)),
            # activations: (TB, TN, C) lane-dense block
            pl.BlockSpec((tb, tn, C), lambda i, j: (i, j, 0)),
        ],
        out_specs=pl.BlockSpec((tb, tn, C), lambda i, j: (i, j, 0)),
        compiler_params=pltpu.CompilerParams(
            dimension_semantics=("parallel", "parallel")),  # v7x: shard over 2 TCs
    )(scale, x)


@functools.partial(jax.jit, static_argnums=(2,))
def _drop_path_train(x3, rand, keep_prob):
    # Per-sample scalar math done once in f32 on the (B,)-vector (essentially free);
    # mask/keep_prob (== x * (1/keep_prob) for kept samples) differs from torch's
    # x.div(keep_prob) by at most ~1 ulp.
    scale = (jnp.floor(keep_prob + rand) / keep_prob).astype(jnp.float32)
    scale = scale.reshape(x3.shape[0], 1, 1)
    return _drop_path_pallas(x3, scale)


def drop_path(x, key, drop_prob: float = 0.0, training: bool = False):
    """Pallas TPU port of drop_path / DropPath.forward (per-sample stochastic depth)."""
    if drop_prob == 0.0 or not training:
        return x                                  # identity, as in PyTorch
    keep_prob = 1.0 - drop_prob
    B = x.shape[0]
    rand = jax.random.uniform(key, (B,), dtype=jnp.float32)

    # Normalize to (B, N, C) for the kernel; DropPath broadcasts over all
    # non-batch dims, so flattening them is semantics-preserving.
    orig_shape = x.shape
    if x.ndim == 1:
        x3 = x.reshape(B, 1, 1)
    elif x.ndim == 2:
        x3 = x.reshape(B, 1, orig_shape[1])
    else:
        n = 1
        for d in orig_shape[1:-1]:
            n *= d
        x3 = x.reshape(B, n, orig_shape[-1])

    y = _drop_path_train(x3, rand, float(keep_prob))
    return y.reshape(orig_shape)


if __name__ == "__main__":
    key = jax.random.PRNGKey(0)
    kx, kr, kx2, kr2 = jax.random.split(key, 4)

    drop_prob = 0.25
    keep_prob = 1.0 - drop_prob

    # --- f32, small ViT-style activation (batch, tokens, channels) ---
    B, N, C = 2, 8, 128
    x = jax.random.normal(kx, (B, N, C), dtype=jnp.float32)
    y = drop_path(x, kr, drop_prob=drop_prob, training=True)
    jax.block_until_ready(y)

    u = jax.random.uniform(kr, (B,), dtype=jnp.float32)      # same draws as kernel
    mask = jnp.floor(keep_prob + u)[:, None, None]
    y_ref = x / keep_prob * mask
    assert y.shape == x.shape
    assert bool(jnp.all(jnp.isfinite(y)))
    assert bool(jnp.allclose(y, y_ref, atol=1e-5, rtol=1e-5))

    # --- bf16 activations kept native end-to-end, multi-sample blocks ---
    B2, N2, C2 = 8, 16, 128
    xb = jax.random.normal(kx2, (B2, N2, C2), dtype=jnp.bfloat16)
    yb = drop_path(xb, kr2, drop_prob=drop_prob, training=True)
    jax.block_until_ready(yb)

    ub = jax.random.uniform(kr2, (B2,), dtype=jnp.float32)
    scaleb = (jnp.floor(keep_prob + ub) / keep_prob)[:, None, None]
    yb_ref = (xb.astype(jnp.float32) * scaleb).astype(jnp.bfloat16)
    assert yb.dtype == jnp.bfloat16
    assert bool(jnp.allclose(yb.astype(jnp.float32), yb_ref.astype(jnp.float32),
                             atol=1e-2, rtol=1e-2))

    # --- inference / drop_prob==0 paths are identity ---
    y_eval = drop_path(x, kr, drop_prob=drop_prob, training=False)
    assert bool(jnp.array_equal(y_eval, x))
    y_p0 = drop_path(x, kr, drop_prob=0.0, training=True)
    assert bool(jnp.array_equal(y_p0, x))

    print("KERNEL_OK")
</pallas_src>

<mosaic_0001>
module attributes {stable_mosaic.version = 11 : i64} {
  func.func @_drop_path_kernel(%arg0: i32, %arg1: i32, %arg2: memref<2x1x1xf32, #tpu.memory_space<vmem>>, %arg3: memref<2x8x128xf32, #tpu.memory_space<vmem>>, %arg4: memref<2x8x128xf32, #tpu.memory_space<vmem>>) attributes {dimension_semantics = [#tpu.dimension_semantics<parallel>, #tpu.dimension_semantics<parallel>], iteration_bounds = array<i64: 1, 1>, scalar_prefetch = 0 : i64, scratch_operands = 0 : i64, tpu.core_type = #tpu.core_type<tc>, window_params = [{transform_indices = @transform_0, window_bounds = array<i64: 2, 1, 1>}, {transform_indices = @transform_1, window_bounds = array<i64: 2, 8, 128>}, {transform_indices = @transform_2, window_bounds = array<i64: 2, 8, 128>}]} {
    %c0 = arith.constant 0 : index
    %c0_0 = arith.constant 0 : index
    %c0_1 = arith.constant 0 : index
    %0 = vector.load %arg3[%c0, %c0_0, %c0_1] : memref<2x8x128xf32, #tpu.memory_space<vmem>>, vector<2x8x128xf32>
    %c0_2 = arith.constant 0 : index
    %c0_3 = arith.constant 0 : index
    %c0_4 = arith.constant 0 : index
    %1 = vector.load %arg2[%c0_2, %c0_3, %c0_4] : memref<2x1x1xf32, #tpu.memory_space<vmem>>, vector<2x1x1xf32>
    %2 = vector.broadcast %1 : vector<2x1x1xf32> to vector<2x8x128xf32>
    %3 = arith.mulf %0, %2 : vector<2x8x128xf32>
    %c0_5 = arith.constant 0 : index
    %c0_6 = arith.constant 0 : index
    %c0_7 = arith.constant 0 : index
    %4 = vector.load %arg4[%c0_5, %c0_6, %c0_7] : memref<2x8x128xf32, #tpu.memory_space<vmem>>, vector<2x8x128xf32>
    tpu.vector_store %arg4[%c0_5, %c0_6, %c0_7], %3 {strides = array<i32>} : memref<2x8x128xf32, #tpu.memory_space<vmem>>, vector<2x8x128xf32>,
    return
  }
  func.func @transform_0(%arg0: i32, %arg1: i32) -> (i32, i32, i32) {
    %c0_i32 = arith.constant 0 : i32
    %c0_i32_0 = arith.constant 0 : i32
    %c0_i32_1 = arith.constant 0 : i32
    return %arg0, %c0_i32, %c0_i32_0 : i32, i32, i32
  }
  func.func @transform_1(%arg0: i32, %arg1: i32) -> (i32, i32, i32) {
    %c0_i32 = arith.constant 0 : i32
    %c0_i32_0 = arith.constant 0 : i32
    return %arg0, %arg1, %c0_i32 : i32, i32, i32
  }
  func.func @transform_2(%arg0: i32, %arg1: i32) -> (i32, i32, i32) {
    %c0_i32 = arith.constant 0 : i32
    %c0_i32_0 = arith.constant 0 : i32
    return %arg0, %arg1, %c0_i32 : i32, i32, i32
  }
}

</mosaic_0001>

<llo_original>
// kernel: _drop_path_pallas.1
$region0: #{_drop_path_pallas.1}
  #allocation0 [shape = 'u32[]', space=smem, size = 0x4, offset = 0x4, fixed_abs, tag = 'smem constant byte address 0x4 - core index']
  #allocation1 [shape = 'u32[144,128]{1,0:T(1,128)}', space=vmem, size = 0x12000, scoped, tag = 'internal scratch']
  %s0 = inlined_call_operand.vmem [shape: f32[2,1,1], index: 0, kind: input, shape index: {}]
  %s1 = inlined_call_operand.hbm [shape: f32[2,8,128], index: 1, kind: input, shape index: {}]
  %s2 = inlined_call_operand.hbm [shape: f32[2,8,128], index: 2, kind: output, shape index: {}]
  %s3 = sld [smem:[#allocation0]]
  $region22: #{_drop_path_pallas.1} parent=0
    _
  %s5 = ssub.s32 1, %s3
  %s6 = scalar_select 0, %s5, %s3
  $region1: #{_drop_path_pallas.1} parent=0
    #allocation2 [shape = 'u8[8192]{0}', space=vmem, size = 0x2000, scoped, tag = 'input window, operand 1, single buffered']
    #allocation3 [shape = 's32[1]{0}', space=sflag, size = 0x4, scoped, tag = 'scoped memory for _drop_path_pallas.1']
    #allocation4 [shape = 's32[1]{0}', space=sflag, size = 0x4, scoped, tag = 'scoped memory for _drop_path_pallas.1']
    #allocation5 [shape = 'u8[8192]{0}', space=vmem, size = 0x2000, scoped, tag = 'output window, operand 0, single buffered']
    %7 = vsyncpa [#allocation3], 0
    %8 = vsyncpa [#allocation4], 0
    // Predicated region
    $region2: #{_drop_path_pallas.1} parent=1 // pred_check
      _
    $region3: #{_drop_path_pallas.1} parent=1 // pred_check_branch
      %10 = sbr.rel (0) target = $region5
    $region4: #{_drop_path_pallas.1} parent=1 // pred_region
      _
    $region5: #{_drop_path_pallas.1} parent=1 // pred_fallthru
      _
    // Predicated region
    $region6: #{_drop_path_pallas.1} parent=1 // pred_check
      _
    $region7: #{_drop_path_pallas.1} parent=1 // pred_check_branch
      %12 = sbr.rel (0) target = $region9
    $region8: #{_drop_path_pallas.1} parent=1 // pred_region
      %s14 = ssub.s32 256, 256
      %15 = vsyncadd [#allocation3], %s14
      %s16 = sshll.u32 [#allocation2], 4
      %s17 = int_to_ptr.vmem [resolvable:$true] %s16
      %22 = dma.hbm_to_vmem [thread:$0]  %s1, 256, %s17, [#allocation3], 128, 128, 8
    $region9: #{_drop_path_pallas.1} parent=1 // pred_fallthru
      _
    // Predicated region
    $region10: #{_drop_path_pallas.1} parent=1 // pred_check
      _
    $region11: #{_drop_path_pallas.1} parent=1 // pred_check_branch
      %24 = sbr.rel (0) target = $region13
    $region12: #{_drop_path_pallas.1} parent=1 // pred_region
      %25 = dma.done [#allocation3], 256
    $region13: #{_drop_path_pallas.1} parent=1 // pred_fallthru
      _
    %v26 = vld [vmem:[#allocation2] sm:$0xff]
    %v27 = vld [vmem:[#allocation2 + $0x8] sm:$0xff]
    %v28 = vld [vmem:[%s0] sm:$0x1]
    %v29 = vld [vmem:[%s0 + $0x1] sm:$0x1]
    %v32 = vlaneseq
    %v33 = vshrl.u32 %v32, 7
    %v34 = vsub.s32 0, %v33
    %v35 = vrot.slane %v28, %v34
    %v36 = vlaneseq
    %v37 = vshrl.u32 %v36, 7
    %v38 = vsub.s32 0, %v37
    %v39 = vrot.slane %v29, %v38
    %40 = vset.pattern.permute.xlu0 0
    %41 = vperm.xlu0 %40, %v35
    %v42 = vpop.permute.xlu0 %41
    %44 = vset.pattern.permute.xlu0 0
    %45 = vperm.xlu0 %44, %v39
    %v46 = vpop.permute.xlu0 %45
    %v48 = vmul.f32 %v26, %v42
    %v49 = vmul.f32 %v27, %v46
    %50 = vst [vmem:[#allocation5] sm:$0xff] %v48
    %51 = vst [vmem:[#allocation5 + $0x8] sm:$0xff] %v49
    // Predicated region
    $region14: #{_drop_path_pallas.1} parent=1 // pred_check
      _
    $region15: #{_drop_path_pallas.1} parent=1 // pred_check_branch
      %53 = sbr.rel (0) target = $region17
    $region16: #{_drop_path_pallas.1} parent=1 // pred_region
      %s55 = ssub.s32 256, 256
      %56 = vsyncadd [#allocation4], %s55
      %s57 = sshll.u32 [#allocation5], 4
      %s58 = int_to_ptr.vmem [resolvable:$true] %s57
      %63 = dma.vmem_to_hbm [thread:$0]  %s58, 256, %s2, [#allocation4], 128, 128, 8
    $region17: #{_drop_path_pallas.1} parent=1 // pred_fallthru
      _
    // Predicated region
    $region18: #{_drop_path_pallas.1} parent=1 // pred_check
      _
    $region19: #{_drop_path_pallas.1} parent=1 // pred_check_branch
      %65 = sbr.rel (0) target = $region21
    $region20: #{_drop_path_pallas.1} parent=1 // pred_region
      %66 = dma.done [#allocation4], 256
    $region21: #{_drop_path_pallas.1} parent=1 // pred_fallthru
      _
    %67 = vsyncpa [#allocation3], 1
    %68 = vsyncpa [#allocation4], 1

</llo_original>
